<compile_context>
chip_gen: v7x
topology: tpu7x:2x2x1
jax: 0.10.0
libtpu: 0.0.40
codegen_flags: <defaults>
</compile_context>

<pallas_src>
import jax
import jax.numpy as jnp
import numpy as np
from jax.experimental import pallas as pl
from jax.experimental.pallas import tpu as pltpu


def _to_pair(v):
    if isinstance(v, (tuple, list)):
        return tuple(v)
    return (v, v)


def _ceil_div(a, b):
    return -(-a // b)


def _round_up(a, b):
    return _ceil_div(a, b) * b


def _pool_out_size(L, k, s, p, d, ceil_mode):
    eff = d * (k - 1) + 1
    if ceil_mode:
        o = _ceil_div(L + 2 * p - eff, s) + 1
        if (o - 1) * s >= L + p:   # PyTorch rule: window must start inside input+left pad
            o -= 1
    else:
        o = (L + 2 * p - eff) // s + 1
    return o


def _vmem_budget():
    """Generation-aware VMEM sizing.

    Returns (working_set_budget_bytes, requested_scoped_vmem_limit_bytes).
    v5e/v6e have 128 MiB physical VMEM, v7x only 64 MiB per TensorCore, so the
    double-buffered working set is capped at 24 MiB and scaled down on chips
    with less VMEM.
    """
    cap = 64 << 20  # conservative default == v7x per-TC physical VMEM
    try:
        info = pltpu.get_tpu_info()
        cap = int(getattr(info, "vmem_capacity_bytes", cap)) or cap
    except Exception:
        pass
    budget = min(24 << 20, max(8 << 20, cap // 5))
    limit = min(64 << 20, cap // 2)
    return budget, limit


def _complex_maxpool_kernel(win_ref, out_ref):
    # win_ref: (2, KK, TM, L) f32 — [0] = real taps, [1] = imag taps.
    # out_ref: (2, TM, L) f32     — [0] = selected real, [1] = selected imag.
    kk = win_ref.shape[1]
    best_re = win_ref[0, 0]
    best_im = win_ref[1, 0]
    # Squared magnitude is monotone in |z| -> same argmax, no sqrt needed.
    best_mag = best_re * best_re + best_im * best_im
    for j in range(1, kk):            # static, small (kH*kW) loop
        rj = win_ref[0, j]
        ij = win_ref[1, j]
        mj = rj * rj + ij * ij
        upd = mj > best_mag           # strict '>' => first tap (row-major) wins ties
        best_mag = jnp.where(upd, mj, best_mag)
        best_re = jnp.where(upd, rj, best_re)
        best_im = jnp.where(upd, ij, best_im)
    # PyTorch reconstructs |z|*(cos + i sin)(angle(z)) == z, so emit z directly.
    out_ref[0] = best_re
    out_ref[1] = best_im


def complex_max_pool2d(x, kernel_size, stride=None, padding=0, dilation=1,
                       ceil_mode=False, return_indices=False):
    if return_indices:
        # TODO(synk): return_indices=True has no clean Pallas equivalent here.
        raise NotImplementedError("return_indices=True not supported")
    kH, kW = _to_pair(kernel_size)
    sH, sW = (kH, kW) if stride is None else _to_pair(stride)
    pH, pW = _to_pair(padding)
    dH, dW = _to_pair(dilation)

    N, C, H, W = x.shape
    Hout = _pool_out_size(H, kH, sH, pH, dH, ceil_mode)
    Wout = _pool_out_size(W, kW, sW, pW, dW, ceil_mode)
    KK = kH * kW
    M = N * C * Hout * Wout
    if M == 0:
        return jnp.zeros((N, C, Hout, Wout), dtype=jnp.complex64)

    if x.dtype != jnp.complex64:
        x = x.astype(jnp.complex64)
    re = jnp.real(x).astype(jnp.float32)
    im = jnp.imag(x).astype(jnp.float32)

    # Zero-pad only if the windows actually reach outside the input.
    # Padded positions have |z| = 0 and never beat a real element; an all-pad
    # window yields 0+0j.
    need_H = (Hout - 1) * sH + dH * (kH - 1) + 1
    need_W = (Wout - 1) * sW + dW * (kW - 1) + 1
    pad_h = (pH, max(0, need_H - H - pH))
    pad_w = (pW, max(0, need_W - W - pW))
    if any(p > 0 for p in pad_h + pad_w):
        cfg = ((0, 0), (0, 0), pad_h, pad_w)
        re = jnp.pad(re, cfg)
        im = jnp.pad(im, cfg)

    # ---- lane-dense layout + tile sizing (done BEFORE building the tap slab
    #      so the tail padding to M_pad fuses into the single gather pass) ----
    # Lane-dense 2D layout: (rows, L) with L a multiple of 128 (<= 512) so the
    # kernel's output stores are unmasked full-lane vst's.
    L = min(512, _round_up(M, 128))
    rows = _ceil_div(M, L)

    budget_bytes, vmem_limit = _vmem_budget()
    # Double-buffered working set per grid step:
    #   2 bufs * 4 B * (2*KK input planes + 2 output planes) * tm * L
    tm = budget_bytes // (16 * L * (KK + 1))
    tm = max(8, (tm // 8) * 8)

    if rows <= 8:
        tm = rows                      # block dim == full dim -> always legal
        nsteps = 1
    else:
        # v7x megacore: guarantee >= 2 (prefer >= 4) steps on the parallel axis.
        desired = 4 if rows >= 32 else 2
        tm = min(tm, max(8, _round_up(_ceil_div(rows, desired), 8)))
        # Balance tm against rows so rows_pad = nsteps*tm never nearly doubles
        # the HBM traffic (e.g. rows = tm+1 previously padded to 2*tm).
        nsteps = _ceil_div(rows, tm)
        tm = max(8, _round_up(_ceil_div(rows, nsteps), 8))
        nsteps = _ceil_div(rows, tm)
    rows_pad = nsteps * tm
    M_pad = rows_pad * L

    # ---- tap gather (XLA strided slices), pad fused into the stack pass ----
    # Each tap is flattened and tail-padded to M_pad *before* stacking, so the
    # slice+pad producers fuse into the single concatenate that materializes
    # the (2, KK, rows_pad, L) slab — no separate pad copy of the largest array.
    taps = []
    for plane in (re, im):
        for kh in range(kH):
            for kw in range(kW):
                h0, h1 = kh * dH, kh * dH + sH * (Hout - 1) + 1
                w0, w1 = kw * dW, kw * dW + sW * (Wout - 1) + 1
                t = plane[:, :, h0:h1:sH, w0:w1:sW].reshape(M)
                if M_pad != M:
                    t = jnp.pad(t, (0, M_pad - M))
                taps.append(t)
    win = jnp.stack(taps, axis=0).reshape(2, KK, rows_pad, L)

    # Advisory cost estimate: ~7 VPU ops per tap per element, pure HBM-bound.
    flops = 7 * KK * M_pad
    bytes_accessed = (2 * KK + 2) * 4 * M_pad

    out2 = pl.pallas_call(
        _complex_maxpool_kernel,
        out_shape=jax.ShapeDtypeStruct((2, rows_pad, L), jnp.float32),
        grid=(nsteps,),
        in_specs=[pl.BlockSpec((2, KK, tm, L), lambda i: (0, 0, i, 0))],
        out_specs=pl.BlockSpec((2, tm, L), lambda i: (0, i, 0)),
        compiler_params=pltpu.CompilerParams(
            dimension_semantics=("parallel",),
            vmem_limit_bytes=int(vmem_limit)),
        cost_estimate=pl.CostEstimate(flops=int(flops), transcendentals=0,
                                      bytes_accessed=int(bytes_accessed)),
    )(win)

    out_flat = out2.reshape(2, M_pad)[:, :M]
    # TODO(synk): consumers that accept split re/im planes could skip this
    # complex-interleave pass (one extra read+write over the output only).
    out = jax.lax.complex(out_flat[0], out_flat[1])   # complex64
    return out.reshape(N, C, Hout, Wout)


class ComplexMaxPool3d:
    """JAX/Pallas port of cu_net ComplexMaxPool3d (stateless, no parameters)."""

    def __init__(self, kernel_size, stride=None, padding=0, dilation=1,
                 return_indices=False, ceil_mode=False):
        self.kernel_size = kernel_size
        self.stride = stride
        self.padding = padding
        self.dilation = dilation
        self.ceil_mode = ceil_mode
        self.return_indices = return_indices

    def __call__(self, x):
        return complex_max_pool2d(x, kernel_size=self.kernel_size,
                                  stride=self.stride, padding=self.padding,
                                  dilation=self.dilation,
                                  ceil_mode=self.ceil_mode,
                                  return_indices=self.return_indices)


def _ref_complex_max_pool2d(x_np, kH, kW, sH, sW, pH, pW, dH, dW, ceil_mode):
    """Slow pure-numpy reference (same tie-break: first tap in row-major order)."""
    N, C, H, W = x_np.shape
    Hout = _pool_out_size(H, kH, sH, pH, dH, ceil_mode)
    Wout = _pool_out_size(W, kW, sW, pW, dW, ceil_mode)
    out = np.zeros((N, C, Hout, Wout), dtype=np.complex64)
    for n in range(N):
        for c in range(C):
            for oh in range(Hout):
                for ow in range(Wout):
                    best = 0.0 + 0.0j
                    best_mag = -1.0
                    for kh in range(kH):
                        for kw in range(kW):
                            h = oh * sH - pH + kh * dH
                            w = ow * sW - pW + kw * dW
                            if 0 <= h < H and 0 <= w < W:
                                v = x_np[n, c, h, w]
                                m = abs(v)
                            else:
                                v = 0.0 + 0.0j
                                m = 0.0
                            if m > best_mag:
                                best_mag = m
                                best = v
                    out[n, c, oh, ow] = best
    return out


if __name__ == "__main__":
    key = jax.random.PRNGKey(0)
    k1, k2 = jax.random.split(key)
    N, C, H, W = 2, 4, 16, 16
    re = jax.random.normal(k1, (N, C, H, W), dtype=jnp.float32)
    im = jax.random.normal(k2, (N, C, H, W), dtype=jnp.float32)
    x = (re + 1j * im).astype(jnp.complex64)
    x_np = np.asarray(x)

    # Config 1: kernel_size=2 (stride defaults to kernel_size).
    y1 = ComplexMaxPool3d(kernel_size=2)(x)
    jax.block_until_ready(y1)
    assert y1.shape == (N, C, H // 2, W // 2) and y1.dtype == jnp.complex64
    ref1 = _ref_complex_max_pool2d(x_np, 2, 2, 2, 2, 0, 0, 1, 1, False)
    assert np.allclose(np.asarray(y1), ref1, atol=1e-6), "mismatch (config 1)"

    # Config 2: overlapping windows with padding.
    y2 = ComplexMaxPool3d(kernel_size=3, stride=2, padding=1)(x)
    jax.block_until_ready(y2)
    ref2 = _ref_complex_max_pool2d(x_np, 3, 3, 2, 2, 1, 1, 1, 1, False)
    assert y2.shape == ref2.shape and y2.dtype == jnp.complex64
    assert np.allclose(np.asarray(y2), ref2, atol=1e-6), "mismatch (config 2)"

    print("KERNEL_OK")
</pallas_src>

<mosaic_0001>
module attributes {stable_mosaic.version = 11 : i64} {
  func.func @_complex_maxpool_kernel(%arg0: i32, %arg1: memref<2x4x1x512xf32, #tpu.memory_space<vmem>>, %arg2: memref<2x1x512xf32, #tpu.memory_space<vmem>>) attributes {dimension_semantics = [#tpu.dimension_semantics<parallel>], iteration_bounds = array<i64: 1>, scalar_prefetch = 0 : i64, scratch_operands = 0 : i64, tpu.core_type = #tpu.core_type<tc>, window_params = [{transform_indices = @transform_0, window_bounds = array<i64: 2, 4, 1, 512>}, {transform_indices = @transform_1, window_bounds = array<i64: 2, 1, 512>}]} {
    %c0 = arith.constant 0 : index
    %c0_0 = arith.constant 0 : index
    %c0_1 = arith.constant 0 : index
    %c0_2 = arith.constant 0 : index
    %0 = vector.load %arg1[%c0, %c0_0, %c0_1, %c0_2] : memref<2x4x1x512xf32, #tpu.memory_space<vmem>>, vector<1x1x1x512xf32>
    %1 = vector.shape_cast %0 : vector<1x1x1x512xf32> to vector<1x512xf32>
    %c1 = arith.constant 1 : index
    %c0_3 = arith.constant 0 : index
    %c0_4 = arith.constant 0 : index
    %c0_5 = arith.constant 0 : index
    %2 = vector.load %arg1[%c1, %c0_3, %c0_4, %c0_5] : memref<2x4x1x512xf32, #tpu.memory_space<vmem>>, vector<1x1x1x512xf32>
    %3 = vector.shape_cast %2 : vector<1x1x1x512xf32> to vector<1x512xf32>
    %4 = arith.mulf %1, %1 : vector<1x512xf32>
    %5 = arith.mulf %3, %3 : vector<1x512xf32>
    %6 = arith.addf %4, %5 : vector<1x512xf32>
    %c0_6 = arith.constant 0 : index
    %c1_7 = arith.constant 1 : index
    %c0_8 = arith.constant 0 : index
    %c0_9 = arith.constant 0 : index
    %7 = vector.load %arg1[%c0_6, %c1_7, %c0_8, %c0_9] : memref<2x4x1x512xf32, #tpu.memory_space<vmem>>, vector<1x1x1x512xf32>
    %8 = vector.shape_cast %7 : vector<1x1x1x512xf32> to vector<1x512xf32>
    %c1_10 = arith.constant 1 : index
    %c1_11 = arith.constant 1 : index
    %c0_12 = arith.constant 0 : index
    %c0_13 = arith.constant 0 : index
    %9 = vector.load %arg1[%c1_10, %c1_11, %c0_12, %c0_13] : memref<2x4x1x512xf32, #tpu.memory_space<vmem>>, vector<1x1x1x512xf32>
    %10 = vector.shape_cast %9 : vector<1x1x1x512xf32> to vector<1x512xf32>
    %11 = arith.mulf %8, %8 : vector<1x512xf32>
    %12 = arith.mulf %10, %10 : vector<1x512xf32>
    %13 = arith.addf %11, %12 : vector<1x512xf32>
    %14 = arith.cmpf ogt, %13, %6 : vector<1x512xf32>
    %15 = arith.select %14, %13, %6 : vector<1x512xi1>, vector<1x512xf32>
    %16 = arith.select %14, %8, %1 : vector<1x512xi1>, vector<1x512xf32>
    %17 = arith.select %14, %10, %3 : vector<1x512xi1>, vector<1x512xf32>
    %c0_14 = arith.constant 0 : index
    %c2 = arith.constant 2 : index
    %c0_15 = arith.constant 0 : index
    %c0_16 = arith.constant 0 : index
    %18 = vector.load %arg1[%c0_14, %c2, %c0_15, %c0_16] : memref<2x4x1x512xf32, #tpu.memory_space<vmem>>, vector<1x1x1x512xf32>
    %19 = vector.shape_cast %18 : vector<1x1x1x512xf32> to vector<1x512xf32>
    %c1_17 = arith.constant 1 : index
    %c2_18 = arith.constant 2 : index
    %c0_19 = arith.constant 0 : index
    %c0_20 = arith.constant 0 : index
    %20 = vector.load %arg1[%c1_17, %c2_18, %c0_19, %c0_20] : memref<2x4x1x512xf32, #tpu.memory_space<vmem>>, vector<1x1x1x512xf32>
    %21 = vector.shape_cast %20 : vector<1x1x1x512xf32> to vector<1x512xf32>
    %22 = arith.mulf %19, %19 : vector<1x512xf32>
    %23 = arith.mulf %21, %21 : vector<1x512xf32>
    %24 = arith.addf %22, %23 : vector<1x512xf32>
    %25 = arith.cmpf ogt, %24, %15 : vector<1x512xf32>
    %26 = arith.select %25, %24, %15 : vector<1x512xi1>, vector<1x512xf32>
    %27 = arith.select %25, %19, %16 : vector<1x512xi1>, vector<1x512xf32>
    %28 = arith.select %25, %21, %17 : vector<1x512xi1>, vector<1x512xf32>
    %c0_21 = arith.constant 0 : index
    %c3 = arith.constant 3 : index
    %c0_22 = arith.constant 0 : index
    %c0_23 = arith.constant 0 : index
    %29 = vector.load %arg1[%c0_21, %c3, %c0_22, %c0_23] : memref<2x4x1x512xf32, #tpu.memory_space<vmem>>, vector<1x1x1x512xf32>
    %30 = vector.shape_cast %29 : vector<1x1x1x512xf32> to vector<1x512xf32>
    %c1_24 = arith.constant 1 : index
    %c3_25 = arith.constant 3 : index
    %c0_26 = arith.constant 0 : index
    %c0_27 = arith.constant 0 : index
    %31 = vector.load %arg1[%c1_24, %c3_25, %c0_26, %c0_27] : memref<2x4x1x512xf32, #tpu.memory_space<vmem>>, vector<1x1x1x512xf32>
    %32 = vector.shape_cast %31 : vector<1x1x1x512xf32> to vector<1x512xf32>
    %33 = arith.mulf %30, %30 : vector<1x512xf32>
    %34 = arith.mulf %32, %32 : vector<1x512xf32>
    %35 = arith.addf %33, %34 : vector<1x512xf32>
    %36 = arith.cmpf ogt, %35, %26 : vector<1x512xf32>
    %37 = arith.select %36, %30, %27 : vector<1x512xi1>, vector<1x512xf32>
    %38 = arith.select %36, %32, %28 : vector<1x512xi1>, vector<1x512xf32>
    %c0_28 = arith.constant 0 : index
    %c0_29 = arith.constant 0 : index
    %c0_30 = arith.constant 0 : index
    %39 = vector.load %arg2[%c0_28, %c0_29, %c0_30] : memref<2x1x512xf32, #tpu.memory_space<vmem>>, vector<1x1x512xf32>
    %40 = vector.shape_cast %39 : vector<1x1x512xf32> to vector<1x512xf32>
    %41 = vector.shape_cast %37 : vector<1x512xf32> to vector<1x1x512xf32>
    tpu.vector_store %arg2[%c0_28, %c0_29, %c0_30], %41 {strides = array<i32>} : memref<2x1x512xf32, #tpu.memory_space<vmem>>, vector<1x1x512xf32>,
    %c1_31 = arith.constant 1 : index
    %c0_32 = arith.constant 0 : index
    %c0_33 = arith.constant 0 : index
    %42 = vector.load %arg2[%c1_31, %c0_32, %c0_33] : memref<2x1x512xf32, #tpu.memory_space<vmem>>, vector<1x1x512xf32>
    %43 = vector.shape_cast %42 : vector<1x1x512xf32> to vector<1x512xf32>
    %44 = vector.shape_cast %38 : vector<1x512xf32> to vector<1x1x512xf32>
    tpu.vector_store %arg2[%c1_31, %c0_32, %c0_33], %44 {strides = array<i32>} : memref<2x1x512xf32, #tpu.memory_space<vmem>>, vector<1x1x512xf32>,
    return
  }
  func.func @transform_0(%arg0: i32) -> (i32, i32, i32, i32) {
    %c0_i32 = arith.constant 0 : i32
    %c0_i32_0 = arith.constant 0 : i32
    %c0_i32_1 = arith.constant 0 : i32
    %c0_i32_2 = arith.constant 0 : i32
    return %c0_i32, %c0_i32_0, %arg0, %c0_i32_1 : i32, i32, i32, i32
  }
  func.func @transform_1(%arg0: i32) -> (i32, i32, i32) {
    %c0_i32 = arith.constant 0 : i32
    %c0_i32_0 = arith.constant 0 : i32
    %c0_i32_1 = arith.constant 0 : i32
    return %c0_i32, %arg0, %c0_i32_0 : i32, i32, i32
  }
}

</mosaic_0001>

<llo_original>
// kernel: tpu_custom_call.1
$region0: #{tpu_custom_call.1}
  #allocation0 [shape = 'u32[]', space=smem, size = 0x4, offset = 0x4, fixed_abs, tag = 'smem constant byte address 0x4 - core index']
  #allocation1 [shape = 'u32[144,128]{1,0:T(1,128)}', space=vmem, size = 0x12000, scoped, tag = 'internal scratch']
  %s0 = inlined_call_operand.hbm [shape: f32[2,4,1,512], index: 0, kind: input, shape index: {}]
  %s1 = inlined_call_operand.hbm [shape: f32[2,1,512], index: 1, kind: output, shape index: {}]
  %s2 = sld [smem:[#allocation0]]
  $region18: #{tpu_custom_call.1} parent=0
    _
  %s4 = ssub.s32 1, %s2
  %s5 = scalar_select 0, %s4, %s2
  $region1: #{tpu_custom_call.1} parent=0
    #allocation2 [shape = 'u8[16384]{0}', space=vmem, size = 0x4000, scoped, tag = 'input window, operand 0, single buffered']
    #allocation3 [shape = 's32[1]{0}', space=sflag, size = 0x4, scoped, tag = 'scoped memory for tpu_custom_call.1']
    #allocation4 [shape = 's32[1]{0}', space=sflag, size = 0x4, scoped, tag = 'scoped memory for tpu_custom_call.1']
    #allocation5 [shape = 'u8[4096]{0}', space=vmem, size = 0x1000, scoped, tag = 'output window, operand 0, single buffered']
    %6 = vsyncpa [#allocation3], 0
    %7 = vsyncpa [#allocation4], 0
    // Predicated region
    $region2: #{tpu_custom_call.1} parent=1 // pred_check
      _
    $region3: #{tpu_custom_call.1} parent=1 // pred_check_branch
      %9 = sbr.rel (0) target = $region5
    $region4: #{tpu_custom_call.1} parent=1 // pred_region
      %s11 = ssub.s32 512, 512
      %12 = vsyncadd [#allocation3], %s11
      %s13 = sshll.u32 [#allocation2], 4
      %s14 = int_to_ptr.vmem [resolvable:$true] %s13
      %19 = dma.hbm_to_vmem [thread:$0]  %s0, 512, %s14, [#allocation3], 64, 64, 4
    $region5: #{tpu_custom_call.1} parent=1 // pred_fallthru
      _
    // Predicated region
    $region6: #{tpu_custom_call.1} parent=1 // pred_check
      _
    $region7: #{tpu_custom_call.1} parent=1 // pred_check_branch
      %21 = sbr.rel (0) target = $region9
    $region8: #{tpu_custom_call.1} parent=1 // pred_region
      %22 = dma.done [#allocation3], 512
    $region9: #{tpu_custom_call.1} parent=1 // pred_fallthru
      _
    %v23 = vld [vmem:[#allocation2] sm:$0xf]
    %s24 = scalar_lea.vmem [#allocation2], 16
    %v25 = vld [vmem:[%s24] sm:$0xf]
    %v26 = vmul.f32 %v23, %v23
    %v27 = vmul.f32 %v25, %v25
    %v28 = vadd.f32 %v26, %v27
    %s29 = scalar_lea.vmem [#allocation2], 4
    %v30 = vld [vmem:[%s29] sm:$0xf]
    %s31 = scalar_lea.vmem [#allocation2], 20
    %v32 = vld [vmem:[%s31] sm:$0xf]
    %v33 = vmul.f32 %v30, %v30
    %v34 = vmul.f32 %v32, %v32
    %v35 = vadd.f32 %v33, %v34
    %vm36 = vcmp.gt.f32.partialorder %v35, %v28
    %v37 = vsel %vm36, %v35, %v28
    %v38 = vsel %vm36, %v30, %v23
    %v39 = vsel %vm36, %v32, %v25
    %s40 = scalar_lea.vmem [#allocation2], 8
    %v41 = vld [vmem:[%s40] sm:$0xf]
    %s42 = scalar_lea.vmem [#allocation2], 24
    %v43 = vld [vmem:[%s42] sm:$0xf]
    %v44 = vmul.f32 %v41, %v41
    %v45 = vmul.f32 %v43, %v43
    %v46 = vadd.f32 %v44, %v45
    %vm47 = vcmp.gt.f32.partialorder %v46, %v37
    %v48 = vsel %vm47, %v46, %v37
    %v49 = vsel %vm47, %v41, %v38
    %v50 = vsel %vm47, %v43, %v39
    %s51 = scalar_lea.vmem [#allocation2], 12
    %v52 = vld [vmem:[%s51] sm:$0xf]
    %s53 = scalar_lea.vmem [#allocation2], 28
    %v54 = vld [vmem:[%s53] sm:$0xf]
    %v55 = vmul.f32 %v52, %v52
    %v56 = vmul.f32 %v54, %v54
    %v57 = vadd.f32 %v55, %v56
    %vm58 = vcmp.gt.f32.partialorder %v57, %v48
    %v59 = vsel %vm58, %v52, %v49
    %v60 = vsel %vm58, %v54, %v50
    %v61 = vlaneseq
    %vm62 = vcmp.ge.s32.totalorder %v61, 0
    %vm63 = vcmp.lt.s32.totalorder %v61, 512
    %vm64 = vmand %vm62, %vm63
    %65 = vst.msk [vmem:[#allocation5] sm:$0xf] %vm64, %v59
    %s66 = scalar_lea.vmem [#allocation5], 4
    %67 = vst.msk [vmem:[%s66] sm:$0xf] %vm64, %v60
    // Predicated region
    $region10: #{tpu_custom_call.1} parent=1 // pred_check
      _
    $region11: #{tpu_custom_call.1} parent=1 // pred_check_branch
      %69 = sbr.rel (0) target = $region13
    $region12: #{tpu_custom_call.1} parent=1 // pred_region
      %s71 = ssub.s32 128, 128
      %72 = vsyncadd [#allocation4], %s71
      %s73 = sshll.u32 [#allocation5], 4
      %s74 = int_to_ptr.vmem [resolvable:$true] %s73
      %79 = dma.vmem_to_hbm [thread:$0]  %s74, 128, %s1, [#allocation4], 64, 64, 4
    $region13: #{tpu_custom_call.1} parent=1 // pred_fallthru
      _
    // Predicated region
    $region14: #{tpu_custom_call.1} parent=1 // pred_check
      _
    $region15: #{tpu_custom_call.1} parent=1 // pred_check_branch
      %81 = sbr.rel (0) target = $region17
    $region16: #{tpu_custom_call.1} parent=1 // pred_region
      %82 = dma.done [#allocation4], 128
    $region17: #{tpu_custom_call.1} parent=1 // pred_fallthru
      _
    %83 = vsyncpa [#allocation3], 1
    %84 = vsyncpa [#allocation4], 1

</llo_original>
